<compile_context>
chip_gen: v7x
topology: tpu7x:2x2x1
jax: 0.10.0
libtpu: 0.0.40
codegen_flags: <defaults>
</compile_context>

<pallas_src>
import jax
import jax.numpy as jnp
from jax.experimental import pallas as pl
from jax.experimental.pallas import tpu as pltpu

FEATURE_DIM = 320   # 'facebook/esm2_t6_8M_UR50D'
HIDDEN_DIM = 512
OUT_DIM = 256
LN_EPS = 1e-5


def _round_up(n, m):
    return ((n + m - 1) // m) * m


def _layernormnet_kernel(x_ref, w1_ref, b1_ref, g1_ref, beta1_ref,
                         w3_ref, b3_ref, o_ref):
    # Resident weights / params (constant index_map -> not re-fetched across grid steps).
    w1 = w1_ref[...]          # (F, H) bf16
    w3 = w3_ref[...]          # (H, O) bf16
    b1 = b1_ref[...]          # (1, H) f32
    g1 = g1_ref[...]          # (1, H) f32
    beta1 = beta1_ref[...]    # (1, H) f32
    b3 = b3_ref[...]          # (1, O) f32

    tb = x_ref.shape[0]
    # Split into 2 sub-chunks only when each sub-chunk still has >= 256 rows, so the
    # MXU amortizes its W1/W3 weight-tile pushes over a large M while the LLO scheduler
    # overlaps MXU pushes of chunk j+1 with LN/ReLU (VPU/XLU/EUP) work of chunk j.
    # TODO(synk): if bundle dumps show W1/W3 re-pushed per sub-chunk dominating vex slots,
    # hold weights stationary with pltpu.matmul_push_rhs / matmul_acc_lhs.
    n_sub = 2 if tb >= 512 else 1
    sub = tb // n_sub
    inv_h = 1.0 / HIDDEN_DIM

    for j in range(n_sub):                                          # static -> unrolled
        # bf16 only at the MXU boundary; x is DMA'd as f32 (no extra XLA cast pass).
        x = x_ref[j * sub:(j + 1) * sub, :].astype(jnp.bfloat16)    # (sub, F)

        # fc1 — bf16 MXU inputs, f32 accumulation.
        h = jnp.dot(x, w1, preferred_element_type=jnp.float32) + b1  # (sub, H) f32

        # LayerNorm over last dim (biased variance, eps inside rsqrt — PyTorch semantics).
        # One-pass stats: the two reductions are independent (parallel XLU issue);
        # var clamped at 0 to guard against cancellation.
        row_sum = jnp.sum(h, axis=-1, keepdims=True)
        row_sqsum = jnp.sum(h * h, axis=-1, keepdims=True)
        mean = row_sum * inv_h
        var = jnp.maximum(row_sqsum * inv_h - mean * mean, 0.0)
        hn = (h - mean) * jax.lax.rsqrt(var + LN_EPS)
        hn = hn * g1 + beta1

        # dropout is identity at inference.
        # TODO(synk): training-mode dropout (p = configs drop_out) not implemented; eval-mode identity used.

        # relu
        hn = jnp.maximum(hn, 0.0)

        # fc3 — cast activation to bf16 only at the dot boundary.
        y = jnp.dot(hn.astype(jnp.bfloat16), w3,
                    preferred_element_type=jnp.float32) + b3          # (sub, O) f32
        o_ref[j * sub:(j + 1) * sub, :] = y.astype(o_ref.dtype)


def layernormnet_forward(x, params, *, tb=1024, out_dtype=jnp.float32):
    """x: (B, FEATURE_DIM) f32.  params: dict of weights in (in, out) layout.

    tb: max batch tile (sweep 512-1024). Effective tile is clamped:
      * small batches: tb_eff = round_up(B, 8) so latency scales with B,
      * B >= 512:      tb_eff <= round_up(cdiv(B, 2), 256) so the grid has >= 2
                       "parallel" steps and both v7x TensorCores are used.
    Ragged last tiles are handled by Pallas (OOB rows are per-row garbage on read and
    dropped on the masked output store), so no host-side padding copy is made.
    out_dtype: set to jnp.bfloat16 to halve output writeback (largest win on v5e).
    """
    B, F = x.shape
    assert F == FEATURE_DIM

    tb_eff = max(8, min(tb, _round_up(B, 8)))
    if B >= 512:
        tb_eff = min(tb_eff, _round_up(pl.cdiv(B, 2), 256))
    n_tiles = pl.cdiv(B, tb_eff)

    # Weights cast to bf16 once (tiny, one-time): halves weight DMA and hits the fast MXU path.
    w1 = params["w1"].astype(jnp.bfloat16)
    w3 = params["w3"].astype(jnp.bfloat16)
    b1, g1, beta1, b3 = params["b1"], params["g1"], params["beta1"], params["b3"]

    out_itemsize = jnp.dtype(out_dtype).itemsize
    cost = pl.CostEstimate(
        flops=2 * B * (FEATURE_DIM * HIDDEN_DIM + HIDDEN_DIM * OUT_DIM),
        transcendentals=B,                             # one rsqrt per row
        bytes_accessed=(B * FEATURE_DIM * 4            # x (f32)
                        + B * OUT_DIM * out_itemsize   # y
                        + FEATURE_DIM * HIDDEN_DIM * 2 + HIDDEN_DIM * OUT_DIM * 2
                        + (3 * HIDDEN_DIM + OUT_DIM) * 4),
    )

    out = pl.pallas_call(
        _layernormnet_kernel,
        out_shape=jax.ShapeDtypeStruct((B, OUT_DIM), out_dtype),
        grid_spec=pltpu.PrefetchScalarGridSpec(
            num_scalar_prefetch=0,
            grid=(n_tiles,),
            in_specs=[
                pl.BlockSpec((tb_eff, FEATURE_DIM), lambda i: (i, 0)),       # x tile (f32)
                pl.BlockSpec((FEATURE_DIM, HIDDEN_DIM), lambda i: (0, 0)),   # W1 (bf16)
                pl.BlockSpec((1, HIDDEN_DIM), lambda i: (0, 0)),             # b1
                pl.BlockSpec((1, HIDDEN_DIM), lambda i: (0, 0)),             # ln1 gamma
                pl.BlockSpec((1, HIDDEN_DIM), lambda i: (0, 0)),             # ln1 beta
                pl.BlockSpec((HIDDEN_DIM, OUT_DIM), lambda i: (0, 0)),       # W3 (bf16)
                pl.BlockSpec((1, OUT_DIM), lambda i: (0, 0)),                # b3
            ],
            out_specs=pl.BlockSpec((tb_eff, OUT_DIM), lambda i: (i, 0)),
        ),
        compiler_params=pltpu.CompilerParams(
            dimension_semantics=("parallel",)),
        cost_estimate=cost,
    )(x, w1, b1, g1, beta1, w3, b3)

    return out


def init_params(key):
    """Deterministic synthetic init. Linear weights stored as (in_dim, out_dim)
    (i.e. PyTorch's weight.T), LayerNorm as gamma=1, beta=0."""
    k1, k2, k3, k4 = jax.random.split(key, 4)
    bound1 = 1.0 / (FEATURE_DIM ** 0.5)
    bound3 = 1.0 / (HIDDEN_DIM ** 0.5)
    return {
        "w1": jax.random.uniform(k1, (FEATURE_DIM, HIDDEN_DIM), jnp.float32,
                                 -bound1, bound1),
        "b1": jax.random.uniform(k2, (1, HIDDEN_DIM), jnp.float32, -bound1, bound1),
        "g1": jnp.ones((1, HIDDEN_DIM), jnp.float32),
        "beta1": jnp.zeros((1, HIDDEN_DIM), jnp.float32),
        "w3": jax.random.uniform(k3, (HIDDEN_DIM, OUT_DIM), jnp.float32,
                                 -bound3, bound3),
        "b3": jax.random.uniform(k4, (1, OUT_DIM), jnp.float32, -bound3, bound3),
    }


def _reference(x, p):
    h = x @ p["w1"] + p["b1"]
    mean = jnp.mean(h, axis=-1, keepdims=True)
    var = jnp.mean((h - mean) ** 2, axis=-1, keepdims=True)
    h = (h - mean) / jnp.sqrt(var + LN_EPS) * p["g1"] + p["beta1"]
    h = jnp.maximum(h, 0.0)
    return h @ p["w3"] + p["b3"]


if __name__ == "__main__":
    key = jax.random.PRNGKey(0)
    kx, kp = jax.random.split(key)

    B = 16  # small test batch; tb is clamped to 16 so no wasted tile work
    x = jax.random.normal(kx, (B, FEATURE_DIM), jnp.float32)
    params = init_params(kp)

    out = layernormnet_forward(x, params)
    out = jax.block_until_ready(out)

    ref = _reference(x, params)
    assert out.shape == (B, OUT_DIM)
    # Tolerance accounts for bf16 matmul inputs (f32 accumulation, f32 LayerNorm math).
    assert jnp.allclose(out, ref, atol=3e-2, rtol=3e-2), "mismatch vs reference"

    print("KERNEL_OK")
</pallas_src>

<mosaic_0001>
module attributes {stable_mosaic.version = 11 : i64} {
  func.func @_layernormnet_kernel(%arg0: i32, %arg1: memref<16x320xf32, #tpu.memory_space<vmem>>, %arg2: memref<320x512xbf16, #tpu.memory_space<vmem>>, %arg3: memref<1x512xf32, #tpu.memory_space<vmem>>, %arg4: memref<1x512xf32, #tpu.memory_space<vmem>>, %arg5: memref<1x512xf32, #tpu.memory_space<vmem>>, %arg6: memref<512x256xbf16, #tpu.memory_space<vmem>>, %arg7: memref<1x256xf32, #tpu.memory_space<vmem>>, %arg8: memref<16x256xf32, #tpu.memory_space<vmem>>) attributes {dimension_semantics = [#tpu.dimension_semantics<parallel>], iteration_bounds = array<i64: 1>, scalar_prefetch = 0 : i64, scratch_operands = 0 : i64, tpu.core_type = #tpu.core_type<tc>, window_params = [{transform_indices = @transform_0, window_bounds = array<i64: 16, 320>}, {pipeline_mode = #tpu.pipeline_mode<synchronous>, transform_indices = @transform_1, window_bounds = array<i64: 320, 512>}, {pipeline_mode = #tpu.pipeline_mode<synchronous>, transform_indices = @transform_2, window_bounds = array<i64: 1, 512>}, {pipeline_mode = #tpu.pipeline_mode<synchronous>, transform_indices = @transform_3, window_bounds = array<i64: 1, 512>}, {pipeline_mode = #tpu.pipeline_mode<synchronous>, transform_indices = @transform_4, window_bounds = array<i64: 1, 512>}, {pipeline_mode = #tpu.pipeline_mode<synchronous>, transform_indices = @transform_5, window_bounds = array<i64: 512, 256>}, {pipeline_mode = #tpu.pipeline_mode<synchronous>, transform_indices = @transform_6, window_bounds = array<i64: 1, 256>}, {transform_indices = @transform_7, window_bounds = array<i64: 16, 256>}]} {
    %c0 = arith.constant 0 : index
    %c0_0 = arith.constant 0 : index
    %0 = vector.load %arg2[%c0, %c0_0] : memref<320x512xbf16, #tpu.memory_space<vmem>>, vector<320x512xbf16>
    %c0_1 = arith.constant 0 : index
    %c0_2 = arith.constant 0 : index
    %1 = vector.load %arg6[%c0_1, %c0_2] : memref<512x256xbf16, #tpu.memory_space<vmem>>, vector<512x256xbf16>
    %c0_3 = arith.constant 0 : index
    %c0_4 = arith.constant 0 : index
    %2 = vector.load %arg3[%c0_3, %c0_4] : memref<1x512xf32, #tpu.memory_space<vmem>>, vector<1x512xf32>
    %c0_5 = arith.constant 0 : index
    %c0_6 = arith.constant 0 : index
    %3 = vector.load %arg4[%c0_5, %c0_6] : memref<1x512xf32, #tpu.memory_space<vmem>>, vector<1x512xf32>
    %c0_7 = arith.constant 0 : index
    %c0_8 = arith.constant 0 : index
    %4 = vector.load %arg5[%c0_7, %c0_8] : memref<1x512xf32, #tpu.memory_space<vmem>>, vector<1x512xf32>
    %c0_9 = arith.constant 0 : index
    %c0_10 = arith.constant 0 : index
    %5 = vector.load %arg7[%c0_9, %c0_10] : memref<1x256xf32, #tpu.memory_space<vmem>>, vector<1x256xf32>
    %c0_11 = arith.constant 0 : index
    %c0_12 = arith.constant 0 : index
    %6 = vector.load %arg1[%c0_11, %c0_12] : memref<16x320xf32, #tpu.memory_space<vmem>>, vector<16x320xf32>
    %7 = arith.truncf %6 : vector<16x320xf32> to vector<16x320xbf16>
    %cst = arith.constant dense<0.000000e+00> : vector<16x512xf32>
    %8 = tpu.matmul %7, %0, %cst {dimension_numbers = #tpu.dot_dimension_numbers<[1], [0], [0], [1], [0, 0, 1, 1], [], []>} : vector<16x320xbf16>, vector<320x512xbf16>, vector<16x512xf32> -> vector<16x512xf32>
    %9 = vector.broadcast %2 : vector<1x512xf32> to vector<16x512xf32>
    %10 = arith.addf %8, %9 : vector<16x512xf32>
    %cst_13 = arith.constant dense<0.000000e+00> : vector<16xf32>
    %11 = vector.multi_reduction <add>, %10, %cst_13 [1] : vector<16x512xf32> to vector<16xf32>
    %12 = vector.shape_cast %11 : vector<16xf32> to vector<16x1xf32>
    %13 = arith.mulf %10, %10 : vector<16x512xf32>
    %cst_14 = arith.constant dense<0.000000e+00> : vector<16xf32>
    %14 = vector.multi_reduction <add>, %13, %cst_14 [1] : vector<16x512xf32> to vector<16xf32>
    %15 = vector.shape_cast %14 : vector<16xf32> to vector<16x1xf32>
    %cst_15 = arith.constant 0.001953125 : f32
    %16 = vector.broadcast %cst_15 : f32 to vector<16x1xf32>
    %17 = arith.mulf %12, %16 : vector<16x1xf32>
    %cst_16 = arith.constant 0.001953125 : f32
    %18 = vector.broadcast %cst_16 : f32 to vector<16x1xf32>
    %19 = arith.mulf %15, %18 : vector<16x1xf32>
    %20 = arith.mulf %17, %17 : vector<16x1xf32>
    %21 = arith.subf %19, %20 : vector<16x1xf32>
    %cst_17 = arith.constant 0.000000e+00 : f32
    %22 = vector.broadcast %cst_17 : f32 to vector<16x1xf32>
    %23 = arith.maximumf %21, %22 : vector<16x1xf32>
    %24 = vector.broadcast %17 : vector<16x1xf32> to vector<16x512xf32>
    %25 = arith.subf %10, %24 : vector<16x512xf32>
    %cst_18 = arith.constant 9.99999974E-6 : f32
    %26 = vector.broadcast %cst_18 : f32 to vector<16x1xf32>
    %27 = arith.addf %23, %26 : vector<16x1xf32>
    %28 = math.rsqrt %27 : vector<16x1xf32>
    %29 = vector.broadcast %28 : vector<16x1xf32> to vector<16x512xf32>
    %30 = arith.mulf %25, %29 : vector<16x512xf32>
    %31 = vector.broadcast %3 : vector<1x512xf32> to vector<16x512xf32>
    %32 = arith.mulf %30, %31 : vector<16x512xf32>
    %33 = vector.broadcast %4 : vector<1x512xf32> to vector<16x512xf32>
    %34 = arith.addf %32, %33 : vector<16x512xf32>
    %cst_19 = arith.constant 0.000000e+00 : f32
    %35 = vector.broadcast %cst_19 : f32 to vector<16x512xf32>
    %36 = arith.maximumf %34, %35 : vector<16x512xf32>
    %37 = arith.truncf %36 : vector<16x512xf32> to vector<16x512xbf16>
    %cst_20 = arith.constant dense<0.000000e+00> : vector<16x256xf32>
    %38 = tpu.matmul %37, %1, %cst_20 {dimension_numbers = #tpu.dot_dimension_numbers<[1], [0], [0], [1], [0, 0, 1, 1], [], []>} : vector<16x512xbf16>, vector<512x256xbf16>, vector<16x256xf32> -> vector<16x256xf32>
    %39 = vector.broadcast %5 : vector<1x256xf32> to vector<16x256xf32>
    %40 = arith.addf %38, %39 : vector<16x256xf32>
    %c0_21 = arith.constant 0 : index
    %c0_22 = arith.constant 0 : index
    %41 = vector.load %arg8[%c0_21, %c0_22] : memref<16x256xf32, #tpu.memory_space<vmem>>, vector<16x256xf32>
    tpu.vector_store %arg8[%c0_21, %c0_22], %40 {strides = array<i32>} : memref<16x256xf32, #tpu.memory_space<vmem>>, vector<16x256xf32>,
    return
  }
  func.func @transform_0(%arg0: i32) -> (i32, i32) {
    %c0_i32 = arith.constant 0 : i32
    %c0_i32_0 = arith.constant 0 : i32
    return %arg0, %c0_i32 : i32, i32
  }
  func.func @transform_1(%arg0: i32) -> (i32, i32) {
    %c0_i32 = arith.constant 0 : i32
    %c0_i32_0 = arith.constant 0 : i32
    %c0_i32_1 = arith.constant 0 : i32
    return %c0_i32, %c0_i32_0 : i32, i32
  }
  func.func @transform_2(%arg0: i32) -> (i32, i32) {
    %c0_i32 = arith.constant 0 : i32
    %c0_i32_0 = arith.constant 0 : i32
    %c0_i32_1 = arith.constant 0 : i32
    return %c0_i32, %c0_i32_0 : i32, i32
  }
  func.func @transform_3(%arg0: i32) -> (i32, i32) {
    %c0_i32 = arith.constant 0 : i32
    %c0_i32_0 = arith.constant 0 : i32
    %c0_i32_1 = arith.constant 0 : i32
    return %c0_i32, %c0_i32_0 : i32, i32
  }
  func.func @transform_4(%arg0: i32) -> (i32, i32) {
    %c0_i32 = arith.constant 0 : i32
    %c0_i32_0 = arith.constant 0 : i32
    %c0_i32_1 = arith.constant 0 : i32
    return %c0_i32, %c0_i32_0 : i32, i32
  }
  func.func @transform_5(%arg0: i32) -> (i32, i32) {
    %c0_i32 = arith.constant 0 : i32
    %c0_i32_0 = arith.constant 0 : i32
    %c0_i32_1 = arith.constant 0 : i32
    return %c0_i32, %c0_i32_0 : i32, i32
  }
  func.func @transform_6(%arg0: i32) -> (i32, i32) {
    %c0_i32 = arith.constant 0 : i32
    %c0_i32_0 = arith.constant 0 : i32
    %c0_i32_1 = arith.constant 0 : i32
    return %c0_i32, %c0_i32_0 : i32, i32
  }
  func.func @transform_7(%arg0: i32) -> (i32, i32) {
    %c0_i32 = arith.constant 0 : i32
    %c0_i32_0 = arith.constant 0 : i32
    return %arg0, %c0_i32 : i32, i32
  }
}

</mosaic_0001>

<llo_original>
// kernel: tpu_custom_call.1
$region0: #{tpu_custom_call.1}
  #allocation0 [shape = 'u32[]', space=smem, size = 0x4, offset = 0x4, fixed_abs, tag = 'smem constant byte address 0x4 - core index']
  #allocation1 [shape = 'u32[144,128]{1,0:T(1,128)}', space=vmem, size = 0x12000, scoped, tag = 'internal scratch']
  %s0 = inlined_call_operand.hbm [shape: f32[16,320], index: 0, kind: input, shape index: {}]
  %s1 = inlined_call_operand.hbm [shape: bf16[320,512], index: 1, kind: input, shape index: {}]
  %s2 = inlined_call_operand.vmem [shape: f32[1,512], index: 2, kind: input, shape index: {}]
  %s3 = inlined_call_operand.vmem [shape: f32[1,512], index: 3, kind: input, shape index: {}]
  %s4 = inlined_call_operand.vmem [shape: f32[1,512], index: 4, kind: input, shape index: {}]
  %s5 = inlined_call_operand.hbm [shape: bf16[512,256], index: 5, kind: input, shape index: {}]
  %s6 = inlined_call_operand.vmem [shape: f32[1,256], index: 6, kind: input, shape index: {}]
  %s7 = inlined_call_operand.hbm [shape: f32[16,256], index: 7, kind: output, shape index: {}]
  %s8 = sld [smem:[#allocation0]]
  $region50: #{tpu_custom_call.1} parent=0
    _
  %s10 = ssub.s32 1, %s8
  %s11 = scalar_select 0, %s10, %s8
  $region1: #{tpu_custom_call.1} parent=0
    #allocation2 [shape = 'u8[24576]{0}', space=vmem, size = 0x6000, scoped, tag = 'input window, operand 0, single buffered']
    #allocation3 [shape = 's32[1]{0}', space=sflag, size = 0x4, scoped, tag = 'scoped memory for tpu_custom_call.1']
    #allocation4 [shape = 's32[1]{0}', space=sflag, size = 0x4, scoped, tag = 'scoped memory for tpu_custom_call.1']
    #allocation5 [shape = 'u8[327680]{0}', space=vmem, size = 0x50000, scoped, tag = 'input window, operand 1, single buffered']
    #allocation6 [shape = 's32[1]{0}', space=sflag, size = 0x4, scoped, tag = 'scoped memory for tpu_custom_call.1']
    #allocation7 [shape = 'u8[262144]{0}', space=vmem, size = 0x40000, scoped, tag = 'input window, operand 5, single buffered']
    #allocation8 [shape = 'u8[16384]{0}', space=vmem, size = 0x4000, scoped, tag = 'output window, operand 0, single buffered']
    %12 = vsyncpa [#allocation3], 0
    %13 = vsyncpa [#allocation6], 0
    %14 = vsyncpa [#allocation4], 0
    // Predicated region
    $region2: #{tpu_custom_call.1} parent=1 // pred_check
      _
    $region3: #{tpu_custom_call.1} parent=1 // pred_check_branch
      %16 = sbr.rel (0) target = $region5
    $region4: #{tpu_custom_call.1} parent=1 // pred_region
      %s18 = ssub.s32 768, 768
      %19 = vsyncadd [#allocation3], %s18
      %s20 = sshll.u32 [#allocation2], 4
      %s21 = int_to_ptr.vmem [resolvable:$true] %s20
      %26 = dma.hbm_to_vmem [thread:$0]  %s0, 768, %s21, [#allocation3], 384, 384, 24
    $region5: #{tpu_custom_call.1} parent=1 // pred_fallthru
      _
    // Predicated region
    $region6: #{tpu_custom_call.1} parent=1 // pred_check
      _
    $region7: #{tpu_custom_call.1} parent=1 // pred_check_branch
      %28 = sbr.rel (0) target = $region9
    $region8: #{tpu_custom_call.1} parent=1 // pred_region
      %s30 = ssub.s32 10240, 10240
      %31 = vsyncadd [#allocation6], %s30
      %s32 = sshll.u32 [#allocation5], 4
      %s33 = int_to_ptr.vmem [resolvable:$true] %s32
      %38 = dma.hbm_to_vmem [thread:$0]  %s1, 10240, %s33, [#allocation6], 256, 256, 16
    $region9: #{tpu_custom_call.1} parent=1 // pred_fallthru
      _
    // Predicated region
    $region10: #{tpu_custom_call.1} parent=1 // pred_check
      _
    $region11: #{tpu_custom_call.1} parent=1 // pred_check_branch
      %40 = sbr.rel (0) target = $region13
    $region12: #{tpu_custom_call.1} parent=1 // pred_region
      _
    $region13: #{tpu_custom_call.1} parent=1 // pred_fallthru
      _
    // Predicated region
    $region14: #{tpu_custom_call.1} parent=1 // pred_check
      _
    $region15: #{tpu_custom_call.1} parent=1 // pred_check_branch
      %42 = sbr.rel (0) target = $region17
    $region16: #{tpu_custom_call.1} parent=1 // pred_region
      _
    $region17: #{tpu_custom_call.1} parent=1 // pred_fallthru
      _
    // Predicated region
    $region18: #{tpu_custom_call.1} parent=1 // pred_check
      _
    $region19: #{tpu_custom_call.1} parent=1 // pred_check_branch
      %44 = sbr.rel (0) target = $region21
    $region20: #{tpu_custom_call.1} parent=1 // pred_region
      _
    $region21: #{tpu_custom_call.1} parent=1 // pred_fallthru
      _
    // Predicated region
    $region22: #{tpu_custom_call.1} parent=1 // pred_check
      _
    $region23: #{tpu_custom_call.1} parent=1 // pred_check_branch
      %46 = sbr.rel (0) target = $region25
    $region24: #{tpu_custom_call.1} parent=1 // pred_region
      %s48 = ssub.s32 8192, 8192
      %49 = vsyncadd [#allocation6], %s48
      %s50 = sshll.u32 [#allocation7], 4
      %s51 = int_to_ptr.vmem [resolvable:$true] %s50
      %56 = dma.hbm_to_vmem [thread:$0]  %s5, 8192, %s51, [#allocation6], 128, 128, 8
    $region25: #{tpu_custom_call.1} parent=1 // pred_fallthru
      _
    // Predicated region
    $region26: #{tpu_custom_call.1} parent=1 // pred_check
      _
    $region27: #{tpu_custom_call.1} parent=1 // pred_check_branch
      %58 = sbr.rel (0) target = $region29
    $region28: #{tpu_custom_call.1} parent=1 // pred_region
      _
    $region29: #{tpu_custom_call.1} parent=1 // pred_fallthru
      _
    // Predicated region
    $region30: #{tpu_custom_call.1} parent=1 // pred_check
      _
    $region31: #{tpu_custom_call.1} parent=1 // pred_check_branch
      %60 = sbr.rel (0) target = $region33
    $region32: #{tpu_custom_call.1} parent=1 // pred_region
      %61 = dma.done [#allocation3], 768
    $region33: #{tpu_custom_call.1} parent=1 // pred_fallthru
      _
    // Predicated region
    $region34: #{tpu_custom_call.1} parent=1 // pred_check
      _
    $region35: #{tpu_custom_call.1} parent=1 // pred_check_branch
      %63 = sbr.rel (0) target = $region37
    $region36: #{tpu_custom_call.1} parent=1 // pred_region
      %64 = dma.done [#allocation6], 10240
    $region37: #{tpu_custom_call.1} parent=1 // pred_fallthru
      _
    // Predicated region
    $region38: #{tpu_custom_call.1} parent=1 // pred_check
      _
    $region39: #{tpu_custom_call.1} parent=1 // pred_check_branch
      %66 = sbr.rel (0) target = $region41
    $region40: #{tpu_custom_call.1} parent=1 // pred_region
      %67 = dma.done [#allocation6], 8192
    $region41: #{tpu_custom_call.1} parent=1 // pred_fallthru
      _
    %v69 = vld [vmem:[#allocation5] sm:$0xff]
    %v70 = vld [vmem:[#allocation5 + $0x8] sm:$0xff]
    %v71 = vld [vmem:[#allocation5 + $0x10] sm:$0xff]
    %v72 = vld [vmem:[#allocation5 + $0x18] sm:$0xff]
    %v73 = vld [vmem:[#allocation5 + $0x20] sm:$0xff]
    %v74 = vld [vmem:[#allocation5 + $0x28] sm:$0xff]
    %v75 = vld [vmem:[#allocation5 + $0x30] sm:$0xff]
    %v76 = vld [vmem:[#allocation5 + $0x38] sm:$0xff]
    %v77 = vld [vmem:[#allocation5 + $0x40] sm:$0xff]
    %v78 = vld [vmem:[#allocation5 + $0x48] sm:$0xff]
    %v79 = vld [vmem:[#allocation5 + $0x50] sm:$0xff]
    %v80 = vld [vmem:[#allocation5 + $0x58] sm:$0xff]
    %v81 = vld [vmem:[#allocation5 + $0x60] sm:$0xff]
    %v82 = vld [vmem:[#allocation5 + $0x68] sm:$0xff]
    %v83 = vld [vmem:[#allocation5 + $0x70] sm:$0xff]
    %v84 = vld [vmem:[#allocation5 + $0x78] sm:$0xff]
    %v85 = vld [vmem:[#allocation5 + $0x80] sm:$0xff]
    %v86 = vld [vmem:[#allocation5 + $0x88] sm:$0xff]
    %v87 = vld [vmem:[#allocation5 + $0x90] sm:$0xff]
    %v88 = vld [vmem:[#allocation5 + $0x98] sm:$0xff]
    %v89 = vld [vmem:[#allocation5 + $0xa0] sm:$0xff]
    %v90 = vld [vmem:[#allocation5 + $0xa8] sm:$0xff]
    %v91 = vld [vmem:[#allocation5 + $0xb0] sm:$0xff]
    %v92 = vld [vmem:[#allocation5 + $0xb8] sm:$0xff]
    %v93 = vld [vmem:[#allocation5 + $0xc0] sm:$0xff]
    %v94 = vld [vmem:[#allocation5 + $0xc8] sm:$0xff]
    %v95 = vld [vmem:[#allocation5 + $0xd0] sm:$0xff]
    %v96 = vld [vmem:[#allocation5 + $0xd8] sm:$0xff]
    %v97 = vld [vmem:[#allocation5 + $0xe0] sm:$0xff]
    %v98 = vld [vmem:[#allocation5 + $0xe8] sm:$0xff]
    %v99 = vld [vmem:[#allocation5 + $0xf0] sm:$0xff]
    %v100 = vld [vmem:[#allocation5 + $0xf8] sm:$0xff]
    %v101 = vld [vmem:[#allocation5 + $0x100] sm:$0xff]
    %v102 = vld [vmem:[#allocation5 + $0x108] sm:$0xff]
    %v103 = vld [vmem:[#allocation5 + $0x110] sm:$0xff]
    %v104 = vld [vmem:[#allocation5 + $0x118] sm:$0xff]
    %v105 = vld [vmem:[#allocation5 + $0x120] sm:$0xff]
    %v106 = vld [vmem:[#allocation5 + $0x128] sm:$0xff]
    %v107 = vld [vmem:[#allocation5 + $0x130] sm:$0xff]
    %v108 = vld [vmem:[#allocation5 + $0x138] sm:$0xff]
    %v109 = vld [vmem:[#allocation5 + $0x140] sm:$0xff]
    %v110 = vld [vmem:[#allocation5 + $0x148] sm:$0xff]
    %v111 = vld [vmem:[#allocation5 + $0x150] sm:$0xff]
    %v112 = vld [vmem:[#allocation5 + $0x158] sm:$0xff]
    %v113 = vld [vmem:[#allocation5 + $0x160] sm:$0xff]
    %v114 = vld [vmem:[#allocation5 + $0x168] sm:$0xff]
    %v115 = vld [vmem:[#allocation5 + $0x170] sm:$0xff]
    %v116 = vld [vmem:[#allocation5 + $0x178] sm:$0xff]
    %v117 = vld [vmem:[#allocation5 + $0x180] sm:$0xff]
    %v118 = vld [vmem:[#allocation5 + $0x188] sm:$0xff]
    %v119 = vld [vmem:[#allocation5 + $0x190] sm:$0xff]
    %v120 = vld [vmem:[#allocation5 + $0x198] sm:$0xff]
    %v121 = vld [vmem:[#allocation5 + $0x1a0] sm:$0xff]
    %v122 = vld [vmem:[#allocation5 + $0x1a8] sm:$0xff]
    %v123 = vld [vmem:[#allocation5 + $0x1b0] sm:$0xff]
    %v124 = vld [vmem:[#allocation5 + $0x1b8] sm:$0xff]
    %v125 = vld [vmem:[#allocation5 + $0x1c0] sm:$0xff]
    %v126 = vld [vmem:[#allocation5 + $0x1c8] sm:$0xff]
    %v127 = vld [vmem:[#allocation5 + $0x1d0] sm:$0xff]
    %v128 = vld [vmem:[#allocation5 + $0x1d8] sm:$0xff]
    %v129 = vld [vmem:[#allocation5 + $0x1e0] sm:$0xff]
    %v130 = vld [vmem:[#allocation5 + $0x1e8] sm:$0xff]
    %v131 = vld [vmem:[#allocation5 + $0x1f0] sm:$0xff]
    %v132 = vld [vmem:[#allocation5 + $0x1f8] sm:$0xff]
    %v133 = vld [vmem:[#allocation5 + $0x200] sm:$0xff]
    %v134 = vld [vmem:[#allocation5 + $0x208] sm:$0xff]
    %v135 = vld [vmem:[#allocation5 + $0x210] sm:$0xff]
    %v136 = vld [vmem:[#allocation5 + $0x218] sm:$0xff]
    %v137 = vld [vmem:[#allocation5 + $0x220] sm:$0xff]
    %v138 = vld [vmem:[#allocation5 + $0x228] sm:$0xff]
    %v139 = vld [vmem:[#allocation5 + $0x230] sm:$0xff]
    %v140 = vld [vmem:[#allocation5 + $0x238] sm:$0xff]
    %v141 = vld [vmem:[#allocation5 + $0x240] sm:$0xff]
    %v142 = vld [vmem:[#allocation5 + $0x248] sm:$0xff]
    %v143 = vld [vmem:[#allocation5 + $0x250] sm:$0xff]
    %v144 = vld [vmem:[#allocation5 + $0x258] sm:$0xff]
    %v145 = vld [vmem:[#allocation5 + $0x260] sm:$0xff]
    %v146 = vld [vmem:[#allocation5 + $0x268] sm:$0xff]
    %v147 = vld [vmem:[#allocation5 + $0x270] sm:$0xff]
    %v148 = vld [vmem:[#allocation5 + $0x278] sm:$0xff]
    %v149 = vld [vmem:[#allocation7] sm:$0xff]
    %v150 = vld [vmem:[#allocation7 + $0x8] sm:$0xff]
    %v151 = vld [vmem:[#allocation7 + $0x10] sm:$0xff]
    %v152 = vld [vmem:[#allocation7 + $0x18] sm:$0xff]
    %v153 = vld [vmem:[#allocation7 + $0x20] sm:$0xff]
    %v154 = vld [vmem:[#allocation7 + $0x28] sm:$0xff]
    %v155 = vld [vmem:[#allocation7 + $0x30] sm:$0xff]
    %v156 = vld [vmem:[#allocation7 + $0x38] sm:$0xff]
    %v157 = vld [vmem:[#allocation7 + $0x40] sm:$0xff]
    %v158 = vld [vmem:[#allocation7 + $0x48] sm:$0xff]
    %v159 = vld [vmem:[#allocation7 + $0x50] sm:$0xff]
    %v160 = vld [vmem:[#allocation7 + $0x58] sm:$0xff]
    %v161 = vld [vmem:[#allocation7 + $0x60] sm:$0xff]
    %v162 = vld [vmem:[#allocation7 + $0x68] sm:$0xff]
    %v163 = vld [vmem:[#allocation7 + $0x70] sm:$0xff]
    %v164 = vld [vmem:[#allocation7 + $0x78] sm:$0xff]
    %v165 = vld [vmem:[#allocation7 + $0x80] sm:$0xff]
    %v166 = vld [vmem:[#allocation7 + $0x88] sm:$0xff]
    %v167 = vld [vmem:[#allocation7 + $0x90] sm:$0xff]
    %v168 = vld [vmem:[#allocation7 + $0x98] sm:$0xff]
    %v169 = vld [vmem:[#allocation7 + $0xa0] sm:$0xff]
    %v170 = vld [vmem:[#allocation7 + $0xa8] sm:$0xff]
    %v171 = vld [vmem:[#allocation7 + $0xb0] sm:$0xff]
    %v172 = vld [vmem:[#allocation7 + $0xb8] sm:$0xff]
    %v173 = vld [vmem:[#allocation7 + $0xc0] sm:$0xff]
    %v174 = vld [vmem:[#allocation7 + $0xc8] sm:$0xff]
    %v175 = vld [vmem:[#allocation7 + $0xd0] sm:$0xff]
    %v176 = vld [vmem:[#allocation7 + $0xd8] sm:$0xff]
    %v177 = vld [vmem:[#allocation7 + $0xe0] sm:$0xff]
    %v178 = vld [vmem:[#allocation7 + $0xe8] sm:$0xff]
    %v179 = vld [vmem:[#allocation7 + $0xf0] sm:$0xff]
    %v180 = vld [vmem:[#allocation7 + $0xf8] sm:$0xff]
    %v181 = vld [vmem:[#allocation7 + $0x100] sm:$0xff]
    %v182 = vld [vmem:[#allocation7 + $0x108] sm:$0xff]
    %v183 = vld [vmem:[#allocation7 + $0x110] sm:$0xff]
    %v184 = vld [vmem:[#allocation7 + $0x118] sm:$0xff]
    %v185 = vld [vmem:[#allocation7 + $0x120] sm:$0xff]
    %v186 = vld [vmem:[#allocation7 + $0x128] sm:$0xff]
    %v187 = vld [vmem:[#allocation7 + $0x130] sm:$0xff]
    %v188 = vld [vmem:[#allocation7 + $0x138] sm:$0xff]
    %v189 = vld [vmem:[#allocation7 + $0x140] sm:$0xff]
    %v190 = vld [vmem:[#allocation7 + $0x148] sm:$0xff]
    %v191 = vld [vmem:[#allocation7 + $0x150] sm:$0xff]
    %v192 = vld [vmem:[#allocation7 + $0x158] sm:$0xff]
    %v193 = vld [vmem:[#allocation7 + $0x160] sm:$0xff]
    %v194 = vld [vmem:[#allocation7 + $0x168] sm:$0xff]
    %v195 = vld [vmem:[#allocation7 + $0x170] sm:$0xff]
    %v196 = vld [vmem:[#allocation7 + $0x178] sm:$0xff]
    %v197 = vld [vmem:[#allocation7 + $0x180] sm:$0xff]
    %v198 = vld [vmem:[#allocation7 + $0x188] sm:$0xff]
    %v199 = vld [vmem:[#allocation7 + $0x190] sm:$0xff]
    %v200 = vld [vmem:[#allocation7 + $0x198] sm:$0xff]
    %v201 = vld [vmem:[#allocation7 + $0x1a0] sm:$0xff]
    %v202 = vld [vmem:[#allocation7 + $0x1a8] sm:$0xff]
    %v203 = vld [vmem:[#allocation7 + $0x1b0] sm:$0xff]
    %v204 = vld [vmem:[#allocation7 + $0x1b8] sm:$0xff]
    %v205 = vld [vmem:[#allocation7 + $0x1c0] sm:$0xff]
    %v206 = vld [vmem:[#allocation7 + $0x1c8] sm:$0xff]
    %v207 = vld [vmem:[#allocation7 + $0x1d0] sm:$0xff]
    %v208 = vld [vmem:[#allocation7 + $0x1d8] sm:$0xff]
    %v209 = vld [vmem:[#allocation7 + $0x1e0] sm:$0xff]
    %v210 = vld [vmem:[#allocation7 + $0x1e8] sm:$0xff]
    %v211 = vld [vmem:[#allocation7 + $0x1f0] sm:$0xff]
    %v212 = vld [vmem:[#allocation7 + $0x1f8] sm:$0xff]
    %v213 = vld [vmem:[%s2] sm:$0xf]
    %v214 = vld [vmem:[%s3] sm:$0xf]
    %v215 = vld [vmem:[%s4] sm:$0xf]
    %v216 = vld [vmem:[%s6] sm:$0x3]
    %v217 = vld [vmem:[#allocation2] sm:$0xff]
    %v218 = vld [vmem:[#allocation2 + $0x8] sm:$0xff]
    %v219 = vld [vmem:[#allocation2 + $0x10] sm:$0xff]
    %v220 = vld [vmem:[#allocation2 + $0x18] sm:$0xff]
    %v221 = vld [vmem:[#allocation2 + $0x20] sm:$0xff]
    %v222 = vld [vmem:[#allocation2 + $0x28] sm:$0xff]
    %v223 = vpack.c.bf16 %v220, %v217
    %v224 = vpack.c.bf16 %v221, %v218
    %v225 = vpack.c.bf16 %v222, %v219
    %v227 = vlaneseq
    %v228 = vshrl.u32 %v227, 7
    %v229 = vsub.s32 0, %v228
    %v230 = vrot.slane %v213, %v229
    %v231 = vlaneseq
    %v232 = vshrl.u32 %v231, 7
    %v233 = vsub.s32 1, %v232
    %v234 = vrot.slane %v213, %v233
    %v235 = vlaneseq
    %v236 = vshrl.u32 %v235, 7
    %v237 = vsub.s32 2, %v236
    %v238 = vrot.slane %v213, %v237
    %v239 = vlaneseq
    %v240 = vshrl.u32 %v239, 7
    %v241 = vsub.s32 3, %v240
    %v242 = vrot.slane %v213, %v241
    %v327 = vunpack.c.l.b16 %v69
    %v328 = vunpack.c.h.b16 %v69
    %v329 = vunpack.c.l.b16 %v70
    %v330 = vunpack.c.h.b16 %v70
    %v331 = vunpack.c.l.b16 %v71
    %v332 = vunpack.c.h.b16 %v71
    %v333 = vunpack.c.l.b16 %v72
    %v334 = vunpack.c.h.b16 %v72
    %v335 = vunpack.c.l.b16 %v73
    %v336 = vunpack.c.h.b16 %v73
    %v337 = vunpack.c.l.b16 %v74
    %v338 = vunpack.c.h.b16 %v74
    %v339 = vunpack.c.l.b16 %v75
    %v340 = vunpack.c.h.b16 %v75
    %v341 = vunpack.c.l.b16 %v76
    %v342 = vunpack.c.h.b16 %v76
    %v343 = vunpack.c.l.b16 %v77
    %v344 = vunpack.c.h.b16 %v77
    %v345 = vunpack.c.l.b16 %v78
    %v346 = vunpack.c.h.b16 %v78
    %v347 = vunpack.c.l.b16 %v79
    %v348 = vunpack.c.h.b16 %v79
    %v349 = vunpack.c.l.b16 %v80
    %v350 = vunpack.c.h.b16 %v80
    %v351 = vunpack.c.l.b16 %v81
    %v352 = vunpack.c.h.b16 %v81
    %v353 = vunpack.c.l.b16 %v82
    %v354 = vunpack.c.h.b16 %v82
    %v355 = vunpack.c.l.b16 %v83
    %v356 = vunpack.c.h.b16 %v83
    %v357 = vunpack.c.l.b16 %v84
    %v358 = vunpack.c.h.b16 %v84
    %v359 = vunpack.c.l.b16 %v85
    %v360 = vunpack.c.h.b16 %v85
    %v361 = vunpack.c.l.b16 %v86
    %v362 = vunpack.c.h.b16 %v86
    %v363 = vunpack.c.l.b16 %v87
    %v364 = vunpack.c.h.b16 %v87
    %v365 = vunpack.c.l.b16 %v88
    %v366 = vunpack.c.h.b16 %v88
    %v367 = vunpack.c.l.b16 %v89
    %v368 = vunpack.c.h.b16 %v89
    %v369 = vunpack.c.l.b16 %v90
    %v370 = vunpack.c.h.b16 %v90
    %v371 = vunpack.c.l.b16 %v91
    %v372 = vunpack.c.h.b16 %v91
    %v373 = vunpack.c.l.b16 %v92
    %v374 = vunpack.c.h.b16 %v92
    %v375 = vunpack.c.l.b16 %v93
    %v376 = vunpack.c.h.b16 %v93
    %v377 = vunpack.c.l.b16 %v94
    %v378 = vunpack.c.h.b16 %v94
    %v379 = vunpack.c.l.b16 %v95
    %v380 = vunpack.c.h.b16 %v95
    %v381 = vunpack.c.l.b16 %v96
    %v382 = vunpack.c.h.b16 %v96
    %v383 = vunpack.c.l.b16 %v97
    %v384 = vunpack.c.h.b16 %v97
    %v385 = vunpack.c.l.b16 %v98
    %v386 = vunpack.c.h.b16 %v98
    %v387 = vunpack.c.l.b16 %v99
    %v388 = vunpack.c.h.b16 %v99
    %v389 = vunpack.c.l.b16 %v100
    %v390 = vunpack.c.h.b16 %v100
    %v391 = vunpack.c.l.b16 %v101
    %v392 = vunpack.c.h.b16 %v101
    %v393 = vunpack.c.l.b16 %v102
    %v394 = vunpack.c.h.b16 %v102
    %v395 = vunpack.c.l.b16 %v103
    %v396 = vunpack.c.h.b16 %v103
    %v397 = vunpack.c.l.b16 %v104
    %v398 = vunpack.c.h.b16 %v104
    %v399 = vunpack.c.l.b16 %v105
    %v400 = vunpack.c.h.b16 %v105
    %v401 = vunpack.c.l.b16 %v106
    %v402 = vunpack.c.h.b16 %v106
    %v403 = vunpack.c.l.b16 %v107
    %v404 = vunpack.c.h.b16 %v107
    %v405 = vunpack.c.l.b16 %v108
    %v406 = vunpack.c.h.b16 %v108
    %v407 = vunpack.c.l.b16 %v109
    %v408 = vunpack.c.h.b16 %v109
    %v409 = vunpack.c.l.b16 %v110
    %v410 = vunpack.c.h.b16 %v110
    %v411 = vunpack.c.l.b16 %v111
    %v412 = vunpack.c.h.b16 %v111
    %v413 = vunpack.c.l.b16 %v112
    %v414 = vunpack.c.h.b16 %v112
    %v415 = vunpack.c.l.b16 %v113
    %v416 = vunpack.c.h.b16 %v113
    %v417 = vunpack.c.l.b16 %v114
    %v418 = vunpack.c.h.b16 %v114
    %v419 = vunpack.c.l.b16 %v115
    %v420 = vunpack.c.h.b16 %v115
    %v421 = vunpack.c.l.b16 %v116
    %v422 = vunpack.c.h.b16 %v116
    %v423 = vunpack.c.l.b16 %v117
    %v424 = vunpack.c.h.b16 %v117
    %v425 = vunpack.c.l.b16 %v118
    %v426 = vunpack.c.h.b16 %v118
    %v427 = vunpack.c.l.b16 %v119
    %v428 = vunpack.c.h.b16 %v119
    %v429 = vunpack.c.l.b16 %v120
    %v430 = vunpack.c.h.b16 %v120
    %v431 = vunpack.c.l.b16 %v121
    %v432 = vunpack.c.h.b16 %v121
    %v433 = vunpack.c.l.b16 %v122
    %v434 = vunpack.c.h.b16 %v122
    %v435 = vunpack.c.l.b16 %v123
    %v436 = vunpack.c.h.b16 %v123
    %v437 = vunpack.c.l.b16 %v124
    %v438 = vunpack.c.h.b16 %v124
    %v439 = vunpack.c.l.b16 %v125
    %v440 = vunpack.c.h.b16 %v125
    %v441 = vunpack.c.l.b16 %v126
    %v442 = vunpack.c.h.b16 %v126
    %v443 = vunpack.c.l.b16 %v127
    %v444 = vunpack.c.h.b16 %v127
    %v445 = vunpack.c.l.b16 %v128
    %v446 = vunpack.c.h.b16 %v128
    %v447 = vunpack.c.l.b16 %v129
    %v448 = vunpack.c.h.b16 %v129
    %v449 = vunpack.c.l.b16 %v130
    %v450 = vunpack.c.h.b16 %v130
    %v451 = vunpack.c.l.b16 %v131
    %v452 = vunpack.c.h.b16 %v131
    %v453 = vunpack.c.l.b16 %v132
    %v454 = vunpack.c.h.b16 %v132
    %v455 = vunpack.c.l.b16 %v133
    %v456 = vunpack.c.h.b16 %v133
    %v457 = vunpack.c.l.b16 %v134
    %v458 = vunpack.c.h.b16 %v134
    %v459 = vunpack.c.l.b16 %v135
    %v460 = vunpack.c.h.b16 %v135
    %v461 = vunpack.c.l.b16 %v136
    %v462 = vunpack.c.h.b16 %v136
    %v463 = vunpack.c.l.b16 %v137
    %v464 = vunpack.c.h.b16 %v137
    %v465 = vunpack.c.l.b16 %v138
    %v466 = vunpack.c.h.b16 %v138
    %v467 = vunpack.c.l.b16 %v139
    %v468 = vunpack.c.h.b16 %v139
    %v469 = vunpack.c.l.b16 %v140
    %v470 = vunpack.c.h.b16 %v140
    %v471 = vunpack.c.l.b16 %v141
    %v472 = vunpack.c.h.b16 %v141
    %v473 = vunpack.c.l.b16 %v142
    %v474 = vunpack.c.h.b16 %v142
    %v475 = vunpack.c.l.b16 %v143
    %v476 = vunpack.c.h.b16 %v143
    %v477 = vunpack.c.l.b16 %v144
    %v478 = vunpack.c.h.b16 %v144
    %v479 = vunpack.c.l.b16 %v145
    %v480 = vunpack.c.h.b16 %v145
    %v481 = vunpack.c.l.b16 %v146
    %v482 = vunpack.c.h.b16 %v146
    %v483 = vunpack.c.l.b16 %v147
    %v484 = vunpack.c.h.b16 %v147
    %v485 = vunpack.c.l.b16 %v148
    %v486 = vunpack.c.h.b16 %v148
    %v487 = vpack.c.b16 %v331, %v327
    %v488 = vpack.c.b16 %v332, %v328
    %v489 = vpack.c.b16 %v333, %v329
    %v490 = vpack.c.b16 %v334, %v330
    %v491 = vpack.c.b16 %v339, %v335
    %v492 = vpack.c.b16 %v340, %v336
    %v493 = vpack.c.b16 %v341, %v337
    %v494 = vpack.c.b16 %v342, %v338
    %v495 = vpack.c.b16 %v347, %v343
    %v496 = vpack.c.b16 %v348, %v344
    %v497 = vpack.c.b16 %v349, %v345
    %v498 = vpack.c.b16 %v350, %v346
    %v499 = vpack.c.b16 %v355, %v351
    %v500 = vpack.c.b16 %v356, %v352
    %v501 = vpack.c.b16 %v357, %v353
    %v502 = vpack.c.b16 %v358, %v354
    %v503 = vpack.c.b16 %v363, %v359
    %v504 = vpack.c.b16 %v364, %v360
    %v505 = vpack.c.b16 %v365, %v361
    %v506 = vpack.c.b16 %v366, %v362
    %v507 = vpack.c.b16 %v371, %v367
    %v508 = vpack.c.b16 %v372, %v368
    %v509 = vpack.c.b16 %v373, %v369
    %v510 = vpack.c.b16 %v374, %v370
    %v511 = vpack.c.b16 %v379, %v375
    %v512 = vpack.c.b16 %v380, %v376
    %v513 = vpack.c.b16 %v381, %v377
    %v514 = vpack.c.b16 %v382, %v378
    %v515 = vpack.c.b16 %v387, %v383
    %v516 = vpack.c.b16 %v388, %v384
    %v517 = vpack.c.b16 %v389, %v385
    %v518 = vpack.c.b16 %v390, %v386
    %v519 = vpack.c.b16 %v395, %v391
    %v520 = vpack.c.b16 %v396, %v392
    %v521 = vpack.c.b16 %v397, %v393
    %v522 = vpack.c.b16 %v398, %v394
    %v523 = vpack.c.b16 %v403, %v399
    %v524 = vpack.c.b16 %v404, %v400
    %v525 = vpack.c.b16 %v405, %v401
    %v526 = vpack.c.b16 %v406, %v402
    %v527 = vpack.c.b16 %v411, %v407
    %v528 = vpack.c.b16 %v412, %v408
    %v529 = vpack.c.b16 %v413, %v409
    %v530 = vpack.c.b16 %v414, %v410
    %v531 = vpack.c.b16 %v419, %v415
    %v532 = vpack.c.b16 %v420, %v416
    %v533 = vpack.c.b16 %v421, %v417
    %v534 = vpack.c.b16 %v422, %v418
    %v535 = vpack.c.b16 %v427, %v423
    %v536 = vpack.c.b16 %v428, %v424
    %v537 = vpack.c.b16 %v429, %v425
    %v538 = vpack.c.b16 %v430, %v426
    %v539 = vpack.c.b16 %v435, %v431
    %v540 = vpack.c.b16 %v436, %v432
    %v541 = vpack.c.b16 %v437, %v433
    %v542 = vpack.c.b16 %v438, %v434
    %v543 = vpack.c.b16 %v443, %v439
    %v544 = vpack.c.b16 %v444, %v440
    %v545 = vpack.c.b16 %v445, %v441
    %v546 = vpack.c.b16 %v446, %v442
    %v547 = vpack.c.b16 %v451, %v447
    %v548 = vpack.c.b16 %v452, %v448
    %v549 = vpack.c.b16 %v453, %v449
    %v550 = vpack.c.b16 %v454, %v450
    %v551 = vpack.c.b16 %v459, %v455
    %v552 = vpack.c.b16 %v460, %v456
    %v553 = vpack.c.b16 %v461, %v457
    %v554 = vpack.c.b16 %v462, %v458
    %v555 = vpack.c.b16 %v467, %v463
    %v556 = vpack.c.b16 %v468, %v464
    %v557 = vpack.c.b16 %v469, %v465
    %v558 = vpack.c.b16 %v470, %v466
    %v559 = vpack.c.b16 %v475, %v471
    %v560 = vpack.c.b16 %v476, %v472
    %v561 = vpack.c.b16 %v477, %v473
    %v562 = vpack.c.b16 %v478, %v474
    %v563 = vpack.c.b16 %v483, %v479
    %v564 = vpack.c.b16 %v484, %v480
    %v565 = vpack.c.b16 %v485, %v481
    %v566 = vpack.c.b16 %v486, %v482
    %vm647 = vcmask 523264
    %v649 = vsel %vm647, %v225, 0
    %651 = vmatprep.subr.bf16.mxu0 %v488
    %652 = vmatpush1.bf16.msra.mxu0 %v487
    %653 = vmatprep.subr.bf16.mxu0 %v492
    %654 = vmatpush1.bf16.msra.mxu0 %v491
    %655 = vmatprep.subr.bf16.mxu0 %v496
    %656 = vmatpush1.bf16.msra.mxu0 %v495
    %657 = vmatprep.subr.bf16.mxu0 %v500
    %658 = vmatpush1.bf16.msra.mxu0 %v499
    %659 = vmatprep.subr.bf16.mxu0 %v504
    %660 = vmatpush1.bf16.msra.mxu0 %v503
    %661 = vmatprep.subr.bf16.mxu0 %v508
    %662 = vmatpush1.bf16.msra.mxu0 %v507
    %663 = vmatprep.subr.bf16.mxu0 %v512
    %664 = vmatpush1.bf16.msra.mxu0 %v511
    %665 = vmatprep.subr.bf16.mxu0 %v516
    %666 = vmatpush1.bf16.msra.mxu0 %v515
    %667 = vmatprep.subr.bf16.mxu0 %v520
    %668 = vmatpush1.bf16.msra.mxu0 %v519
    %669 = vmatprep.subr.bf16.mxu0 %v524
    %670 = vmatpush1.bf16.msra.mxu0 %v523
    %671 = vmatprep.subr.bf16.mxu0 %v528
    %672 = vmatpush1.bf16.msra.mxu0 %v527
    %673 = vmatprep.subr.bf16.mxu0 %v532
    %674 = vmatpush1.bf16.msra.mxu0 %v531
    %675 = vmatprep.subr.bf16.mxu0 %v536
    %676 = vmatpush1.bf16.msra.mxu0 %v535
    %677 = vmatprep.subr.bf16.mxu0 %v540
    %678 = vmatpush1.bf16.msra.mxu0 %v539
    %679 = vmatprep.subr.bf16.mxu0 %v544
    %680 = vmatpush1.bf16.msra.mxu0 %v543
    %681 = vmatprep.subr.bf16.mxu0 %v548
    %682 = vmatpush1.bf16.msra.mxu0 %v547
    %683 = vmatprep.mubr.bf16.mxu0 %v224
    %684 = vmatmul.mubr.bf16.gmra.mrb[0].mxu0 %v223
    %v685 = vpop.f32.mrb[0].mxu0
    %v686 = vadd.f32 %v230, %v685
    %v687 = vpop.f32.mrb[0].mxu0
    %v688 = vadd.f32 %v234, %v687
    %v689 = vpop.f32.mrb[0].mxu0
    %v690 = vadd.f32 %v230, %v689
    %v691 = vpop.f32.mrb[0].mxu0
    %v692 = vadd.f32 %v234, %v691
    %693 = vdwg.mxu0
    %694 = vmatprep.subr.bf16.mxu0 %v552
    %695 = vmatpush1.bf16.msra.mxu0 %v551
    %696 = vmatprep.subr.bf16.mxu0 %v556
    %697 = vmatpush1.bf16.msra.mxu0 %v555
    %698 = vmatprep.subr.bf16.mxu0 %v560
    %699 = vmatpush1.bf16.msra.mxu0 %v559
    %700 = vmatprep.subr.bf16.mxu0 %v564
    %701 = vmatpush1.bf16.msra.mxu0 %v563
    %702 = vmatprep.subr.bf16.mxu0 0
    %703 = vmatpush1.bf16.msra.mxu0 0
    %704 = vmatprep.subr.bf16.mxu0 0
    %705 = vmatpush1.bf16.msra.mxu0 0
    %706 = vmatprep.subr.bf16.mxu0 0
    %707 = vmatpush1.bf16.msra.mxu0 0
    %708 = vmatprep.subr.bf16.mxu0 0
    %709 = vmatpush1.bf16.msra.mxu0 0
    %710 = vmatprep.subr.bf16.mxu0 0
    %711 = vmatpush1.bf16.msra.mxu0 0
    %712 = vmatprep.subr.bf16.mxu0 0
    %713 = vmatpush1.bf16.msra.mxu0 0
    %714 = vmatprep.subr.bf16.mxu0 0
    %715 = vmatpush1.bf16.msra.mxu0 0
    %716 = vmatprep.subr.bf16.mxu0 0
    %717 = vmatpush1.bf16.msra.mxu0 0
    %718 = vmatprep.subr.bf16.mxu0 0
    %719 = vmatpush1.bf16.msra.mxu0 0
    %720 = vmatprep.subr.bf16.mxu0 0
    %721 = vmatpush1.bf16.msra.mxu0 0
    %722 = vmatprep.subr.bf16.mxu0 0
    %723 = vmatpush1.bf16.msra.mxu0 0
    %724 = vmatprep.subr.bf16.mxu0 0
    %725 = vmatpush1.bf16.msra.mxu0 0
    %726 = vmatprep.mubr.bf16.mxu0 0
    %727 = vmatmul.mubr.bf16.gmra.mrb[0].mxu0 %v649
    %v728 = vpop.f32.mrb[0].mxu0
    %v729 = vadd.f32 %v686, %v728
    %v730 = vpop.f32.mrb[0].mxu0
    %v731 = vadd.f32 %v688, %v730
    %v732 = vpop.f32.mrb[0].mxu0
    %v733 = vadd.f32 %v690, %v732
    %v734 = vpop.f32.mrb[0].mxu0
    %v735 = vadd.f32 %v692, %v734
    %736 = vdwg.mxu0
    %737 = vmatprep.subr.bf16.mxu0 %v490
    %738 = vmatpush1.bf16.msra.mxu0 %v489
    %739 = vmatprep.subr.bf16.mxu0 %v494
    %740 = vmatpush1.bf16.msra.mxu0 %v493
    %741 = vmatprep.subr.bf16.mxu0 %v498
    %742 = vmatpush1.bf16.msra.mxu0 %v497
    %743 = vmatprep.subr.bf16.mxu0 %v502
    %744 = vmatpush1.bf16.msra.mxu0 %v501
    %745 = vmatprep.subr.bf16.mxu0 %v506
    %746 = vmatpush1.bf16.msra.mxu0 %v505
    %747 = vmatprep.subr.bf16.mxu0 %v510
    %748 = vmatpush1.bf16.msra.mxu0 %v509
    %749 = vmatprep.subr.bf16.mxu0 %v514
    %750 = vmatpush1.bf16.msra.mxu0 %v513
    %751 = vmatprep.subr.bf16.mxu0 %v518
    %752 = vmatpush1.bf16.msra.mxu0 %v517
    %753 = vmatprep.subr.bf16.mxu0 %v522
    %754 = vmatpush1.bf16.msra.mxu0 %v521
    %755 = vmatprep.subr.bf16.mxu0 %v526
    %756 = vmatpush1.bf16.msra.mxu0 %v525
    %757 = vmatprep.subr.bf16.mxu0 %v530
    %758 = vmatpush1.bf16.msra.mxu0 %v529
    %759 = vmatprep.subr.bf16.mxu0 %v534
    %760 = vmatpush1.bf16.msra.mxu0 %v533
    %761 = vmatprep.subr.bf16.mxu0 %v538
    %762 = vmatpush1.bf16.msra.mxu0 %v537
    %763 = vmatprep.subr.bf16.mxu0 %v542
    %764 = vmatpush1.bf16.msra.mxu0 %v541
    %765 = vmatprep.subr.bf16.mxu0 %v546
    %766 = vmatpush1.bf16.msra.mxu0 %v545
    %767 = vmatprep.subr.bf16.mxu0 %v550
    %768 = vmatpush1.bf16.msra.mxu0 %v549
    %769 = vmatprep.mubr.bf16.mxu0 %v224
    %770 = vmatmul.mubr.bf16.gmra.mrb[0].mxu0 %v223
    %v771 = vpop.f32.mrb[0].mxu0
    %v772 = vadd.f32 %v238, %v771
    %v773 = vpop.f32.mrb[0].mxu0
    %v774 = vadd.f32 %v242, %v773
    %v775 = vpop.f32.mrb[0].mxu0
    %v776 = vadd.f32 %v238, %v775
    %v777 = vpop.f32.mrb[0].mxu0
    %v778 = vadd.f32 %v242, %v777
    %779 = vdwg.mxu0
    %780 = vmatprep.subr.bf16.mxu0 %v554
    %781 = vmatpush1.bf16.msra.mxu0 %v553
    %782 = vmatprep.subr.bf16.mxu0 %v558
    %783 = vmatpush1.bf16.msra.mxu0 %v557
    %784 = vmatprep.subr.bf16.mxu0 %v562
    %785 = vmatpush1.bf16.msra.mxu0 %v561
    %786 = vmatprep.subr.bf16.mxu0 %v566
    %787 = vmatpush1.bf16.msra.mxu0 %v565
    %788 = vmatprep.subr.bf16.mxu0 0
    %789 = vmatpush1.bf16.msra.mxu0 0
    %790 = vmatprep.subr.bf16.mxu0 0
    %791 = vmatpush1.bf16.msra.mxu0 0
    %792 = vmatprep.subr.bf16.mxu0 0
    %793 = vmatpush1.bf16.msra.mxu0 0
    %794 = vmatprep.subr.bf16.mxu0 0
    %795 = vmatpush1.bf16.msra.mxu0 0
    %796 = vmatprep.subr.bf16.mxu0 0
    %797 = vmatpush1.bf16.msra.mxu0 0
    %798 = vmatprep.subr.bf16.mxu0 0
    %799 = vmatpush1.bf16.msra.mxu0 0
    %800 = vmatprep.subr.bf16.mxu0 0
    %801 = vmatpush1.bf16.msra.mxu0 0
    %802 = vmatprep.subr.bf16.mxu0 0
    %803 = vmatpush1.bf16.msra.mxu0 0
    %804 = vmatprep.subr.bf16.mxu0 0
    %805 = vmatpush1.bf16.msra.mxu0 0
    %806 = vmatprep.subr.bf16.mxu0 0
    %807 = vmatpush1.bf16.msra.mxu0 0
    %808 = vmatprep.subr.bf16.mxu0 0
    %809 = vmatpush1.bf16.msra.mxu0 0
    %810 = vmatprep.subr.bf16.mxu0 0
    %811 = vmatpush1.bf16.msra.mxu0 0
    %812 = vmatprep.mubr.bf16.mxu0 0
    %813 = vmatmul.mubr.bf16.gmra.mrb[0].mxu0 %v649
    %v814 = vpop.f32.mrb[0].mxu0
    %v815 = vadd.f32 %v772, %v814
    %v816 = vpop.f32.mrb[0].mxu0
    %v817 = vadd.f32 %v774, %v816
    %v818 = vpop.f32.mrb[0].mxu0
    %v819 = vadd.f32 %v776, %v818
    %v820 = vpop.f32.mrb[0].mxu0
    %v821 = vadd.f32 %v778, %v820
    %822 = vdwg.mxu0
    %v823 = vadd.f32 %v729, %v731
    %v824 = vadd.f32 %v823, %v815
    %v825 = vadd.f32 %v824, %v817
    %826 = vadd.xlane.f32.xlu0 %v825
    %v827 = vpop.xlane.xlu0 %826
    %v828 = vadd.f32 %v733, %v735
    %v829 = vadd.f32 %v828, %v819
    %v830 = vadd.f32 %v829, %v821
    %831 = vadd.xlane.f32.xlu0 %v830
    %v832 = vpop.xlane.xlu0 %831
    %v833 = vmul.f32 %v729, %v729
    %v834 = vmul.f32 %v731, %v731
    %v835 = vmul.f32 %v815, %v815
    %v836 = vmul.f32 %v817, %v817
    %v837 = vmul.f32 %v733, %v733
    %v838 = vmul.f32 %v735, %v735
    %v839 = vmul.f32 %v819, %v819
    %v840 = vmul.f32 %v821, %v821
    %v841 = vadd.f32 %v833, %v834
    %v842 = vadd.f32 %v841, %v835
    %v843 = vadd.f32 %v842, %v836
    %844 = vadd.xlane.f32.xlu0 %v843
    %v845 = vpop.xlane.xlu0 %844
    %v846 = vadd.f32 %v837, %v838
    %v847 = vadd.f32 %v846, %v839
    %v848 = vadd.f32 %v847, %v840
    %849 = vadd.xlane.f32.xlu0 %v848
    %v850 = vpop.xlane.xlu0 %849
    %v851 = vmul.f32 %v827, 0.001953125
    %v852 = vmul.f32 %v832, 0.001953125
    %v853 = vmul.f32 %v845, 0.001953125
    %v854 = vmul.f32 %v850, 0.001953125
    %v855 = vmul.f32 %v851, %v851
    %v856 = vmul.f32 %v852, %v852
    %v857 = vsub.f32 %v853, %v855
    %v858 = vsub.f32 %v854, %v856
    %v859 = vmax.f32 %v857, 0.0
    %v860 = vmax.f32 %v858, 0.0
    %v861 = vsub.f32 %v729, %v851
    %v862 = vsub.f32 %v731, %v851
    %v863 = vsub.f32 %v815, %v851
    %v864 = vsub.f32 %v817, %v851
    %v865 = vsub.f32 %v733, %v852
    %v866 = vsub.f32 %v735, %v852
    %v867 = vsub.f32 %v819, %v852
    %v868 = vsub.f32 %v821, %v852
    %v869 = vadd.f32 %v859, 1e-05
    %v870 = vadd.f32 %v860, 1e-05
    %v871 = vrsqrt.pop %v869
    %v872 = vrsqrt.pop %v870
    %v873 = vmul.f32 %v861, %v871
    %v874 = vmul.f32 %v862, %v871
    %v875 = vmul.f32 %v863, %v871
    %v876 = vmul.f32 %v864, %v871
    %v877 = vmul.f32 %v865, %v872
    %v878 = vmul.f32 %v866, %v872
    %v879 = vmul.f32 %v867, %v872
    %v880 = vmul.f32 %v868, %v872
    %v882 = vlaneseq
    %v883 = vshrl.u32 %v882, 7
    %v884 = vsub.s32 0, %v883
    %v885 = vrot.slane %v214, %v884
    %v886 = vlaneseq
    %v887 = vshrl.u32 %v886, 7
    %v888 = vsub.s32 1, %v887
    %v889 = vrot.slane %v214, %v888
    %v890 = vlaneseq
    %v891 = vshrl.u32 %v890, 7
    %v892 = vsub.s32 2, %v891
    %v893 = vrot.slane %v214, %v892
    %v894 = vlaneseq
    %v895 = vshrl.u32 %v894, 7
    %v896 = vsub.s32 3, %v895
    %v897 = vrot.slane %v214, %v896
    %v902 = vmul.f32 %v873, %v885
    %v903 = vmul.f32 %v874, %v889
    %v904 = vmul.f32 %v875, %v893
    %v905 = vmul.f32 %v876, %v897
    %v906 = vmul.f32 %v877, %v885
    %v907 = vmul.f32 %v878, %v889
    %v908 = vmul.f32 %v879, %v893
    %v909 = vmul.f32 %v880, %v897
    %v911 = vlaneseq
    %v912 = vshrl.u32 %v911, 7
    %v913 = vsub.s32 0, %v912
    %v914 = vrot.slane %v215, %v913
    %v915 = vlaneseq
    %v916 = vshrl.u32 %v915, 7
    %v917 = vsub.s32 1, %v916
    %v918 = vrot.slane %v215, %v917
    %v919 = vlaneseq
    %v920 = vshrl.u32 %v919, 7
    %v921 = vsub.s32 2, %v920
    %v922 = vrot.slane %v215, %v921
    %v923 = vlaneseq
    %v924 = vshrl.u32 %v923, 7
    %v925 = vsub.s32 3, %v924
    %v926 = vrot.slane %v215, %v925
    %v931 = vadd.f32 %v902, %v914
    %v932 = vadd.f32 %v903, %v918
    %v933 = vadd.f32 %v904, %v922
    %v934 = vadd.f32 %v905, %v926
    %v935 = vadd.f32 %v906, %v914
    %v936 = vadd.f32 %v907, %v918
    %v937 = vadd.f32 %v908, %v922
    %v938 = vadd.f32 %v909, %v926
    %v939 = vmax.f32 %v931, 0.0
    %v940 = vmax.f32 %v932, 0.0
    %v941 = vmax.f32 %v933, 0.0
    %v942 = vmax.f32 %v934, 0.0
    %v943 = vmax.f32 %v935, 0.0
    %v944 = vmax.f32 %v936, 0.0
    %v945 = vmax.f32 %v937, 0.0
    %v946 = vmax.f32 %v938, 0.0
    %v947 = vpack.c.bf16 %v943, %v939
    %v948 = vpack.c.bf16 %v944, %v940
    %v949 = vpack.c.bf16 %v945, %v941
    %v950 = vpack.c.bf16 %v946, %v942
    %v952 = vlaneseq
    %v953 = vshrl.u32 %v952, 7
    %v954 = vsub.s32 0, %v953
    %v955 = vrot.slane %v216, %v954
    %v956 = vlaneseq
    %v957 = vshrl.u32 %v956, 7
    %v958 = vsub.s32 1, %v957
    %v959 = vrot.slane %v216, %v958
    %v1026 = vunpack.c.l.b16 %v149
    %v1027 = vunpack.c.h.b16 %v149
    %v1028 = vunpack.c.l.b16 %v150
    %v1029 = vunpack.c.h.b16 %v150
    %v1030 = vunpack.c.l.b16 %v151
    %v1031 = vunpack.c.h.b16 %v151
    %v1032 = vunpack.c.l.b16 %v152
    %v1033 = vunpack.c.h.b16 %v152
    %v1034 = vunpack.c.l.b16 %v153
    %v1035 = vunpack.c.h.b16 %v153
    %v1036 = vunpack.c.l.b16 %v154
    %v1037 = vunpack.c.h.b16 %v154
    %v1038 = vunpack.c.l.b16 %v155
    %v1039 = vunpack.c.h.b16 %v155
    %v1040 = vunpack.c.l.b16 %v156
    %v1041 = vunpack.c.h.b16 %v156
    %v1042 = vunpack.c.l.b16 %v157
    %v1043 = vunpack.c.h.b16 %v157
    %v1044 = vunpack.c.l.b16 %v158
    %v1045 = vunpack.c.h.b16 %v158
    %v1046 = vunpack.c.l.b16 %v159
    %v1047 = vunpack.c.h.b16 %v159
    %v1048 = vunpack.c.l.b16 %v160
    %v1049 = vunpack.c.h.b16 %v160
    %v1050 = vunpack.c.l.b16 %v161
    %v1051 = vunpack.c.h.b16 %v161
    %v1052 = vunpack.c.l.b16 %v162
    %v1053 = vunpack.c.h.b16 %v162
    %v1054 = vunpack.c.l.b16 %v163
    %v1055 = vunpack.c.h.b16 %v163
    %v1056 = vunpack.c.l.b16 %v164
    %v1057 = vunpack.c.h.b16 %v164
    %v1058 = vunpack.c.l.b16 %v165
    %v1059 = vunpack.c.h.b16 %v165
    %v1060 = vunpack.c.l.b16 %v166
    %v1061 = vunpack.c.h.b16 %v166
    %v1062 = vunpack.c.l.b16 %v167
    %v1063 = vunpack.c.h.b16 %v167
    %v1064 = vunpack.c.l.b16 %v168
    %v1065 = vunpack.c.h.b16 %v168
    %v1066 = vunpack.c.l.b16 %v169
    %v1067 = vunpack.c.h.b16 %v169
    %v1068 = vunpack.c.l.b16 %v170
    %v1069 = vunpack.c.h.b16 %v170
    %v1070 = vunpack.c.l.b16 %v171
    %v1071 = vunpack.c.h.b16 %v171
    %v1072 = vunpack.c.l.b16 %v172
    %v1073 = vunpack.c.h.b16 %v172
    %v1074 = vunpack.c.l.b16 %v173
    %v1075 = vunpack.c.h.b16 %v173
    %v1076 = vunpack.c.l.b16 %v174
    %v1077 = vunpack.c.h.b16 %v174
    %v1078 = vunpack.c.l.b16 %v175
    %v1079 = vunpack.c.h.b16 %v175
    %v1080 = vunpack.c.l.b16 %v176
    %v1081 = vunpack.c.h.b16 %v176
    %v1082 = vunpack.c.l.b16 %v177
    %v1083 = vunpack.c.h.b16 %v177
    %v1084 = vunpack.c.l.b16 %v178
    %v1085 = vunpack.c.h.b16 %v178
    %v1086 = vunpack.c.l.b16 %v179
    %v1087 = vunpack.c.h.b16 %v179
    %v1088 = vunpack.c.l.b16 %v180
    %v1089 = vunpack.c.h.b16 %v180
    %v1090 = vunpack.c.l.b16 %v181
    %v1091 = vunpack.c.h.b16 %v181
    %v1092 = vunpack.c.l.b16 %v182
    %v1093 = vunpack.c.h.b16 %v182
    %v1094 = vunpack.c.l.b16 %v183
    %v1095 = vunpack.c.h.b16 %v183
    %v1096 = vunpack.c.l.b16 %v184
    %v1097 = vunpack.c.h.b16 %v184
    %v1098 = vunpack.c.l.b16 %v185
    %v1099 = vunpack.c.h.b16 %v185
    %v1100 = vunpack.c.l.b16 %v186
    %v1101 = vunpack.c.h.b16 %v186
    %v1102 = vunpack.c.l.b16 %v187
    %v1103 = vunpack.c.h.b16 %v187
    %v1104 = vunpack.c.l.b16 %v188
    %v1105 = vunpack.c.h.b16 %v188
    %v1106 = vunpack.c.l.b16 %v189
    %v1107 = vunpack.c.h.b16 %v189
    %v1108 = vunpack.c.l.b16 %v190
    %v1109 = vunpack.c.h.b16 %v190
    %v1110 = vunpack.c.l.b16 %v191
    %v1111 = vunpack.c.h.b16 %v191
    %v1112 = vunpack.c.l.b16 %v192
    %v1113 = vunpack.c.h.b16 %v192
    %v1114 = vunpack.c.l.b16 %v193
    %v1115 = vunpack.c.h.b16 %v193
    %v1116 = vunpack.c.l.b16 %v194
    %v1117 = vunpack.c.h.b16 %v194
    %v1118 = vunpack.c.l.b16 %v195
    %v1119 = vunpack.c.h.b16 %v195
    %v1120 = vunpack.c.l.b16 %v196
    %v1121 = vunpack.c.h.b16 %v196
    %v1122 = vunpack.c.l.b16 %v197
    %v1123 = vunpack.c.h.b16 %v197
    %v1124 = vunpack.c.l.b16 %v198
    %v1125 = vunpack.c.h.b16 %v198
    %v1126 = vunpack.c.l.b16 %v199
    %v1127 = vunpack.c.h.b16 %v199
    %v1128 = vunpack.c.l.b16 %v200
    %v1129 = vunpack.c.h.b16 %v200
    %v1130 = vunpack.c.l.b16 %v201
    %v1131 = vunpack.c.h.b16 %v201
    %v1132 = vunpack.c.l.b16 %v202
    %v1133 = vunpack.c.h.b16 %v202
    %v1134 = vunpack.c.l.b16 %v203
    %v1135 = vunpack.c.h.b16 %v203
    %v1136 = vunpack.c.l.b16 %v204
    %v1137 = vunpack.c.h.b16 %v204
    %v1138 = vunpack.c.l.b16 %v205
    %v1139 = vunpack.c.h.b16 %v205
    %v1140 = vunpack.c.l.b16 %v206
    %v1141 = vunpack.c.h.b16 %v206
    %v1142 = vunpack.c.l.b16 %v207
    %v1143 = vunpack.c.h.b16 %v207
    %v1144 = vunpack.c.l.b16 %v208
    %v1145 = vunpack.c.h.b16 %v208
    %v1146 = vunpack.c.l.b16 %v209
    %v1147 = vunpack.c.h.b16 %v209
    %v1148 = vunpack.c.l.b16 %v210
    %v1149 = vunpack.c.h.b16 %v210
    %v1150 = vunpack.c.l.b16 %v211
    %v1151 = vunpack.c.h.b16 %v211
    %v1152 = vunpack.c.l.b16 %v212
    %v1153 = vunpack.c.h.b16 %v212
    %v1154 = vpack.c.b16 %v1028, %v1026
    %v1155 = vpack.c.b16 %v1029, %v1027
    %v1156 = vpack.c.b16 %v1032, %v1030
    %v1157 = vpack.c.b16 %v1033, %v1031
    %v1158 = vpack.c.b16 %v1036, %v1034
    %v1159 = vpack.c.b16 %v1037, %v1035
    %v1160 = vpack.c.b16 %v1040, %v1038
    %v1161 = vpack.c.b16 %v1041, %v1039
    %v1162 = vpack.c.b16 %v1044, %v1042
    %v1163 = vpack.c.b16 %v1045, %v1043
    %v1164 = vpack.c.b16 %v1048, %v1046
    %v1165 = vpack.c.b16 %v1049, %v1047
    %v1166 = vpack.c.b16 %v1052, %v1050
    %v1167 = vpack.c.b16 %v1053, %v1051
    %v1168 = vpack.c.b16 %v1056, %v1054
    %v1169 = vpack.c.b16 %v1057, %v1055
    %v1170 = vpack.c.b16 %v1060, %v1058
    %v1171 = vpack.c.b16 %v1061, %v1059
    %v1172 = vpack.c.b16 %v1064, %v1062
    %v1173 = vpack.c.b16 %v1065, %v1063
    %v1174 = vpack.c.b16 %v1068, %v1066
    %v1175 = vpack.c.b16 %v1069, %v1067
    %v1176 = vpack.c.b16 %v1072, %v1070
    %v1177 = vpack.c.b16 %v1073, %v1071
    %v1178 = vpack.c.b16 %v1076, %v1074
    %v1179 = vpack.c.b16 %v1077, %v1075
    %v1180 = vpack.c.b16 %v1080, %v1078
    %v1181 = vpack.c.b16 %v1081, %v1079
    %v1182 = vpack.c.b16 %v1084, %v1082
    %v1183 = vpack.c.b16 %v1085, %v1083
    %v1184 = vpack.c.b16 %v1088, %v1086
    %v1185 = vpack.c.b16 %v1089, %v1087
    %v1186 = vpack.c.b16 %v1092, %v1090
    %v1187 = vpack.c.b16 %v1093, %v1091
    %v1188 = vpack.c.b16 %v1096, %v1094
    %v1189 = vpack.c.b16 %v1097, %v1095
    %v1190 = vpack.c.b16 %v1100, %v1098
    %v1191 = vpack.c.b16 %v1101, %v1099
    %v1192 = vpack.c.b16 %v1104, %v1102
    %v1193 = vpack.c.b16 %v1105, %v1103
    %v1194 = vpack.c.b16 %v1108, %v1106
    %v1195 = vpack.c.b16 %v1109, %v1107
    %v1196 = vpack.c.b16 %v1112, %v1110
    %v1197 = vpack.c.b16 %v1113, %v1111
    %v1198 = vpack.c.b16 %v1116, %v1114
    %v1199 = vpack.c.b16 %v1117, %v1115
    %v1200 = vpack.c.b16 %v1120, %v1118
    %v1201 = vpack.c.b16 %v1121, %v1119
    %v1202 = vpack.c.b16 %v1124, %v1122
    %v1203 = vpack.c.b16 %v1125, %v1123
    %v1204 = vpack.c.b16 %v1128, %v1126
    %v1205 = vpack.c.b16 %v1129, %v1127
    %v1206 = vpack.c.b16 %v1132, %v1130
    %v1207 = vpack.c.b16 %v1133, %v1131
    %v1208 = vpack.c.b16 %v1136, %v1134
    %v1209 = vpack.c.b16 %v1137, %v1135
    %v1210 = vpack.c.b16 %v1140, %v1138
    %v1211 = vpack.c.b16 %v1141, %v1139
    %v1212 = vpack.c.b16 %v1144, %v1142
    %v1213 = vpack.c.b16 %v1145, %v1143
    %v1214 = vpack.c.b16 %v1148, %v1146
    %v1215 = vpack.c.b16 %v1149, %v1147
    %v1216 = vpack.c.b16 %v1152, %v1150
    %v1217 = vpack.c.b16 %v1153, %v1151
    %1282 = vmatprep.subr.bf16.mxu0 %v1155
    %1283 = vmatpush1.bf16.msra.mxu0 %v1154
    %1284 = vmatprep.subr.bf16.mxu0 %v1157
    %1285 = vmatpush1.bf16.msra.mxu0 %v1156
    %1286 = vmatprep.subr.bf16.mxu0 %v1159
    %1287 = vmatpush1.bf16.msra.mxu0 %v1158
    %1288 = vmatprep.subr.bf16.mxu0 %v1161
    %1289 = vmatpush1.bf16.msra.mxu0 %v1160
    %1290 = vmatprep.subr.bf16.mxu0 %v1163
    %1291 = vmatpush1.bf16.msra.mxu0 %v1162
    %1292 = vmatprep.subr.bf16.mxu0 %v1165
    %1293 = vmatpush1.bf16.msra.mxu0 %v1164
    %1294 = vmatprep.subr.bf16.mxu0 %v1167
    %1295 = vmatpush1.bf16.msra.mxu0 %v1166
    %1296 = vmatprep.subr.bf16.mxu0 %v1169
    %1297 = vmatpush1.bf16.msra.mxu0 %v1168
    %1298 = vmatprep.subr.bf16.mxu0 %v1171
    %1299 = vmatpush1.bf16.msra.mxu0 %v1170
    %1300 = vmatprep.subr.bf16.mxu0 %v1173
    %1301 = vmatpush1.bf16.msra.mxu0 %v1172
    %1302 = vmatprep.subr.bf16.mxu0 %v1175
    %1303 = vmatpush1.bf16.msra.mxu0 %v1174
    %1304 = vmatprep.subr.bf16.mxu0 %v1177
    %1305 = vmatpush1.bf16.msra.mxu0 %v1176
    %1306 = vmatprep.subr.bf16.mxu0 %v1179
    %1307 = vmatpush1.bf16.msra.mxu0 %v1178
    %1308 = vmatprep.subr.bf16.mxu0 %v1181
    %1309 = vmatpush1.bf16.msra.mxu0 %v1180
    %1310 = vmatprep.subr.bf16.mxu0 %v1183
    %1311 = vmatpush1.bf16.msra.mxu0 %v1182
    %1312 = vmatprep.subr.bf16.mxu0 %v1185
    %1313 = vmatpush1.bf16.msra.mxu0 %v1184
    %1314 = vmatprep.mubr.bf16.mxu0 %v948
    %1315 = vmatmul.mubr.bf16.gmra.mrb[0].mxu0 %v947
    %v1316 = vpop.f32.mrb[0].mxu0
    %v1317 = vadd.f32 %v955, %v1316
    %v1318 = vpop.f32.mrb[0].mxu0
    %v1319 = vadd.f32 %v959, %v1318
    %v1320 = vpop.f32.mrb[0].mxu0
    %v1321 = vadd.f32 %v955, %v1320
    %v1322 = vpop.f32.mrb[0].mxu0
    %v1323 = vadd.f32 %v959, %v1322
    %1324 = vdwg.mxu0
    %1325 = vmatprep.subr.bf16.mxu0 %v1187
    %1326 = vmatpush1.bf16.msra.mxu0 %v1186
    %1327 = vmatprep.subr.bf16.mxu0 %v1189
    %1328 = vmatpush1.bf16.msra.mxu0 %v1188
    %1329 = vmatprep.subr.bf16.mxu0 %v1191
    %1330 = vmatpush1.bf16.msra.mxu0 %v1190
    %1331 = vmatprep.subr.bf16.mxu0 %v1193
    %1332 = vmatpush1.bf16.msra.mxu0 %v1192
    %1333 = vmatprep.subr.bf16.mxu0 %v1195
    %1334 = vmatpush1.bf16.msra.mxu0 %v1194
    %1335 = vmatprep.subr.bf16.mxu0 %v1197
    %1336 = vmatpush1.bf16.msra.mxu0 %v1196
    %1337 = vmatprep.subr.bf16.mxu0 %v1199
    %1338 = vmatpush1.bf16.msra.mxu0 %v1198
    %1339 = vmatprep.subr.bf16.mxu0 %v1201
    %1340 = vmatpush1.bf16.msra.mxu0 %v1200
    %1341 = vmatprep.subr.bf16.mxu0 %v1203
    %1342 = vmatpush1.bf16.msra.mxu0 %v1202
    %1343 = vmatprep.subr.bf16.mxu0 %v1205
    %1344 = vmatpush1.bf16.msra.mxu0 %v1204
    %1345 = vmatprep.subr.bf16.mxu0 %v1207
    %1346 = vmatpush1.bf16.msra.mxu0 %v1206
    %1347 = vmatprep.subr.bf16.mxu0 %v1209
    %1348 = vmatpush1.bf16.msra.mxu0 %v1208
    %1349 = vmatprep.subr.bf16.mxu0 %v1211
    %1350 = vmatpush1.bf16.msra.mxu0 %v1210
    %1351 = vmatprep.subr.bf16.mxu0 %v1213
    %1352 = vmatpush1.bf16.msra.mxu0 %v1212
    %1353 = vmatprep.subr.bf16.mxu0 %v1215
    %1354 = vmatpush1.bf16.msra.mxu0 %v1214
    %1355 = vmatprep.subr.bf16.mxu0 %v1217
    %1356 = vmatpush1.bf16.msra.mxu0 %v1216
    %1357 = vmatprep.mubr.bf16.mxu0 %v950
    %1358 = vmatmul.mubr.bf16.gmra.mrb[0].mxu0 %v949
    %v1359 = vpop.f32.mrb[0].mxu0
    %v1360 = vadd.f32 %v1317, %v1359
    %v1361 = vpop.f32.mrb[0].mxu0
    %v1362 = vadd.f32 %v1319, %v1361
    %v1363 = vpop.f32.mrb[0].mxu0
    %v1364 = vadd.f32 %v1321, %v1363
    %v1365 = vpop.f32.mrb[0].mxu0
    %v1366 = vadd.f32 %v1323, %v1365
    %1367 = vdwg.mxu0
    %1368 = vst [vmem:[#allocation8] sm:$0xff] %v1360
    %1369 = vst [vmem:[#allocation8 + $0x8] sm:$0xff] %v1362
    %1370 = vst [vmem:[#allocation8 + $0x10] sm:$0xff] %v1364
    %1371 = vst [vmem:[#allocation8 + $0x18] sm:$0xff] %v1366
    // Predicated region
    $region42: #{tpu_custom_call.1} parent=1 // pred_check
      _
    $region43: #{tpu_custom_call.1} parent=1 // pred_check_branch
      %1373 = sbr.rel (0) target = $region45
    $region44: #{tpu_custom_call.1} parent=1 // pred_region
      %s1375 = ssub.s32 512, 512
      %1376 = vsyncadd [#allocation4], %s1375
      %s1377 = sshll.u32 [#allocation8], 4
      %s1378 = int_to_ptr.vmem [resolvable:$true] %s1377
      %1383 = dma.vmem_to_hbm [thread:$0]  %s1378, 512, %s7, [#allocation4], 256, 256, 16
    $region45: #{tpu_custom_call.1} parent=1 // pred_fallthru
      _
    // Predicated region
    $region46: #{tpu_custom_call.1} parent=1 // pred_check
      _
    $region47: #{tpu_custom_call.1} parent=1 // pred_check_branch
      %1385 = sbr.rel (0) target = $region49
    $region48: #{tpu_custom_call.1} parent=1 // pred_region
      %1386 = dma.done [#allocation4], 512
    $region49: #{tpu_custom_call.1} parent=1 // pred_fallthru
      _
    %1387 = vsyncpa [#allocation3], 1
    %1388 = vsyncpa [#allocation6], 1
    %1389 = vsyncpa [#allocation4], 1

</llo_original>
